<compile_context>
chip_gen: v7x
topology: tpu7x:2x2x1
jax: 0.10.0
libtpu: 0.0.40
codegen_flags: <defaults>
</compile_context>

<pallas_src>
import functools

import jax
import jax.numpy as jnp
from jax.experimental import pallas as pl
from jax.experimental.pallas import tpu as pltpu


# ------------------------------ small helpers -------------------------------

def _row_chunk(W):
    return max(1, 128 // W)


def _bcast_spec(arr):
    """Full-array block broadcast across the batch grid."""
    return pl.BlockSpec(arr.shape, lambda n, _nd=arr.ndim: (0,) * _nd)


def _make_im2col(read_row, r0, rows, W):
    """(rows*W, 9*C) bf16 matrix of 3x3 taps for output rows r0..r0+rows-1.

    read_row(row) returns padded-input row `row` as a (Wp, C) value.
    Tap order is (ky, kx) row-major, matching w_hwio.reshape(9*C, Cout).
    """
    pieces = []
    for i in range(rows):
        taps = []
        for ky in range(3):
            rowv = read_row(r0 + i + ky)             # (Wp, C)
            for kx in range(3):
                taps.append(rowv[kx:kx + W, :])      # (W, C)
        pieces.append(jnp.concatenate(taps, axis=-1))            # (W, 9C)
    return jnp.concatenate(pieces, axis=0) if rows > 1 else pieces[0]


# ----------------------------- Pallas kernels ------------------------------

def _conv3x3_kernel(x_ref, w_ref, s_ref, b_ref, o_ref, *, H, W, relu, row_chunk):
    # x_ref: (1, H+2, W+2, Cin) bf16 (already padded / dilated by the wrapper)
    # w_ref: (9*Cin, Cout) bf16 ; s_ref/b_ref: (1, Cout) f32 ; o_ref: (1, H, W, Cout)
    w = w_ref[...]
    s = s_ref[...]
    b = b_ref[...]
    read_row = lambda row: x_ref[0, row, :, :]
    r = 0
    while r < H:
        rows = min(row_chunk, H - r)
        mat = _make_im2col(read_row, r, rows, W)                     # (rows*W, 9Cin)
        y = jnp.dot(mat, w, preferred_element_type=jnp.float32)      # (rows*W, Cout)
        y = y * s + b
        if relu:
            y = jnp.maximum(y, 0.0)
        for i in range(rows):
            o_ref[0, r + i, :, :] = y[i * W:(i + 1) * W, :].astype(o_ref.dtype)
        r += rows


def _dense_block_kernel(*refs, H, W, L, out_ch):
    # refs: x, (s1, b1, w1, s2, b2, w2) * L, o, pad_scratch
    x_ref = refs[0]
    o_ref = refs[1 + 6 * L]
    pad_ref = refs[2 + 6 * L]

    pad_ref[...] = jnp.zeros_like(pad_ref)        # zero border for the 3x3 convs
    # running dense concatenation as an f32 value of shape (H*W, C)
    cat = jnp.concatenate([x_ref[0, i, :, :] for i in range(H)],
                          axis=0).astype(jnp.float32)
    read_row = lambda row: pad_ref[row, :, :]

    for l in range(L):
        s1, b1, w1, s2, b2, w2 = refs[1 + 6 * l:7 + 6 * l]
        # BN -> ReLU -> 1x1 conv (bottleneck); bf16 MXU operands, f32 accumulate
        h = jnp.maximum(cat * s1[...] + b1[...], 0.0)
        h = jnp.dot(h.astype(jnp.bfloat16), w1[...],
                    preferred_element_type=jnp.float32)              # (H*W, 16)
        # BN -> ReLU, stash into the zero-padded VMEM scratch (bf16)
        h = jnp.maximum(h * s2[...] + b2[...], 0.0)
        for i in range(H):
            pad_ref[1 + i, 1:1 + W, :] = h[i * W:(i + 1) * W, :].astype(pad_ref.dtype)
        # 3x3 conv (no bias) as a single wide-K matmul
        mat = _make_im2col(read_row, 0, H, W)                        # (H*W, 9*16)
        new = jnp.dot(mat, w2[...], preferred_element_type=jnp.float32)
        cat = jnp.concatenate([cat, new], axis=-1)

    out = cat[:, cat.shape[-1] - out_ch:]
    for i in range(H):
        o_ref[0, i, :, :] = out[i * W:(i + 1) * W, :].astype(o_ref.dtype)


def _double_conv_kernel(x_ref, w1_ref, s1_ref, b1_ref, w2_ref, s2_ref, b2_ref,
                        o_ref, pad_ref, *, H, W, row_chunk):
    pad_ref[...] = jnp.zeros_like(pad_ref)
    w1 = w1_ref[...]; s1 = s1_ref[...]; b1 = b1_ref[...]
    w2 = w2_ref[...]; s2 = s2_ref[...]; b2 = b2_ref[...]
    in_row = lambda row: x_ref[0, row, :, :]
    mid_row = lambda row: pad_ref[row, :, :]

    # conv1 -> BN -> ReLU, result goes into the padded VMEM scratch
    r = 0
    while r < H:
        rows = min(row_chunk, H - r)
        mat = _make_im2col(in_row, r, rows, W)
        h = jnp.dot(mat, w1, preferred_element_type=jnp.float32)
        h = jnp.maximum(h * s1 + b1, 0.0)
        for i in range(rows):
            pad_ref[1 + r + i, 1:1 + W, :] = h[i * W:(i + 1) * W, :].astype(pad_ref.dtype)
        r += rows

    # conv2 -> BN -> ReLU, result goes to the output
    r = 0
    while r < H:
        rows = min(row_chunk, H - r)
        mat = _make_im2col(mid_row, r, rows, W)
        y = jnp.dot(mat, w2, preferred_element_type=jnp.float32)
        y = jnp.maximum(y * s2 + b2, 0.0)
        for i in range(rows):
            o_ref[0, r + i, :, :] = y[i * W:(i + 1) * W, :].astype(o_ref.dtype)
        r += rows


# ----------------------------- kernel wrappers ------------------------------

def _conv3x3_valid(xpad, w_flat, scale, shift, relu=False, out_dtype=jnp.bfloat16):
    """VALID 3x3 conv over an already padded/dilated NHWC input with a fused
    per-channel epilogue: out = conv(xpad, w) * scale + shift (+ optional ReLU)."""
    N, Hp, Wp, Cin = xpad.shape
    H, W = Hp - 2, Wp - 2
    Cout = w_flat.shape[-1]
    xpad = xpad.astype(jnp.bfloat16)
    w_flat = w_flat.astype(jnp.bfloat16)
    scale = scale.reshape(1, Cout).astype(jnp.float32)
    shift = shift.reshape(1, Cout).astype(jnp.float32)
    kernel = functools.partial(_conv3x3_kernel, H=H, W=W, relu=relu,
                               row_chunk=_row_chunk(W))
    return pl.pallas_call(
        kernel,
        out_shape=jax.ShapeDtypeStruct((N, H, W, Cout), out_dtype),
        grid=(N,),
        in_specs=[pl.BlockSpec((1, Hp, Wp, Cin), lambda n: (n, 0, 0, 0)),
                  _bcast_spec(w_flat), _bcast_spec(scale), _bcast_spec(shift)],
        out_specs=pl.BlockSpec((1, H, W, Cout), lambda n: (n, 0, 0, 0)),
        compiler_params=pltpu.CompilerParams(dimension_semantics=("parallel",)),
    )(xpad, w_flat, scale, shift)


def conv3x3_same(x, w_hwio, scale=None, shift=None, relu=False,
                 out_dtype=jnp.bfloat16):
    """'same' 3x3 conv (NHWC / HWIO) with fused affine epilogue."""
    N, H, W, Cin = x.shape
    Cout = w_hwio.shape[-1]
    if scale is None:
        scale = jnp.ones((Cout,), jnp.float32)
    if shift is None:
        shift = jnp.zeros((Cout,), jnp.float32)
    xpad = jnp.pad(x.astype(jnp.bfloat16), ((0, 0), (1, 1), (1, 1), (0, 0)))
    return _conv3x3_valid(xpad, w_hwio.reshape(9 * Cin, Cout), scale, shift,
                          relu, out_dtype)


def conv_transpose3x3_s2(x, w_t, scale, shift, out_dtype=jnp.bfloat16):
    """Exact ConvTranspose2d(k=3, stride=2, padding=0); w_t in PyTorch layout
    (Cin, Cout, 3, 3).  Fused epilogue: out*scale + shift (bias and/or folded BN).
    Implemented as zero-insertion dilation (wrapper) + flipped 3x3 valid conv (kernel)."""
    # NOTE: sub-pixel (4-phase) decomposition would avoid the inserted zeros; at these
    # sizes the extra FLOPs/DMA are negligible, so the simpler exact form is kept.
    N, H, W, Cin = x.shape
    Cout = w_t.shape[1]
    xd = jnp.zeros((N, 2 * H - 1, 2 * W - 1, Cin), jnp.bfloat16)
    xd = xd.at[:, ::2, ::2, :].set(x.astype(jnp.bfloat16))
    xd = jnp.pad(xd, ((0, 0), (2, 2), (2, 2), (0, 0)))
    w = jnp.transpose(w_t[:, :, ::-1, ::-1], (2, 3, 0, 1)).reshape(9 * Cin, Cout)
    return _conv3x3_valid(xd, w, scale, shift, relu=False, out_dtype=out_dtype)


def dense_block_apply(x, layers):
    """Whole _DenseBlock in one pallas_call; returns only the last L*growth channels."""
    N, H, W, C0 = x.shape
    L = len(layers)
    bneck = layers[0]['w1'].shape[1]            # bn_size * growth (16)
    growth = layers[0]['w2'].shape[-1]
    out_ch = L * growth
    x = x.astype(jnp.bfloat16)

    inputs = [x]
    in_specs = [pl.BlockSpec((1, H, W, C0), lambda n: (n, 0, 0, 0))]
    for p in layers:
        s1, b1 = p['bn1']
        s2, b2 = p['bn2']
        arrs = [s1.reshape(1, -1).astype(jnp.float32),
                b1.reshape(1, -1).astype(jnp.float32),
                p['w1'].astype(jnp.bfloat16),
                s2.reshape(1, -1).astype(jnp.float32),
                b2.reshape(1, -1).astype(jnp.float32),
                p['w2'].reshape(9 * bneck, growth).astype(jnp.bfloat16)]
        for a in arrs:
            inputs.append(a)
            in_specs.append(_bcast_spec(a))

    kernel = functools.partial(_dense_block_kernel, H=H, W=W, L=L, out_ch=out_ch)
    return pl.pallas_call(
        kernel,
        out_shape=jax.ShapeDtypeStruct((N, H, W, out_ch), jnp.bfloat16),
        grid=(N,),
        in_specs=in_specs,
        out_specs=pl.BlockSpec((1, H, W, out_ch), lambda n: (n, 0, 0, 0)),
        scratch_shapes=[pltpu.VMEM((H + 2, W + 2, bneck), jnp.bfloat16)],
        compiler_params=pltpu.CompilerParams(dimension_semantics=("parallel",)),
    )(*inputs)


def double_conv_apply(x, p, out_dtype=jnp.float32):
    """DoubleConv (conv3x3->BN->ReLU->conv3x3->BN->ReLU) in one pallas_call."""
    N, H, W, Cin = x.shape
    Ch = p['w1'].shape[-1]
    xpad = jnp.pad(x.astype(jnp.bfloat16), ((0, 0), (1, 1), (1, 1), (0, 0)))
    w1 = p['w1'].reshape(9 * Cin, Ch).astype(jnp.bfloat16)
    w2 = p['w2'].reshape(9 * Ch, Ch).astype(jnp.bfloat16)
    s1 = p['bn1'][0].reshape(1, Ch).astype(jnp.float32)
    b1 = p['bn1'][1].reshape(1, Ch).astype(jnp.float32)
    s2 = p['bn2'][0].reshape(1, Ch).astype(jnp.float32)
    b2 = p['bn2'][1].reshape(1, Ch).astype(jnp.float32)
    kernel = functools.partial(_double_conv_kernel, H=H, W=W, row_chunk=_row_chunk(W))
    return pl.pallas_call(
        kernel,
        out_shape=jax.ShapeDtypeStruct((N, H, W, Ch), out_dtype),
        grid=(N,),
        in_specs=[pl.BlockSpec((1, H + 2, W + 2, Cin), lambda n: (n, 0, 0, 0)),
                  _bcast_spec(w1), _bcast_spec(s1), _bcast_spec(b1),
                  _bcast_spec(w2), _bcast_spec(s2), _bcast_spec(b2)],
        out_specs=pl.BlockSpec((1, H, W, Ch), lambda n: (n, 0, 0, 0)),
        scratch_shapes=[pltpu.VMEM((H + 2, W + 2, Ch), jnp.bfloat16)],
        compiler_params=pltpu.CompilerParams(dimension_semantics=("parallel",)),
    )(xpad, w1, s1, b1, w2, s2, b2)


# ------------------------------ module pieces -------------------------------

def center_crop(x, th, tw):                # NHWC version of the PyTorch helper
    _, h, w, _ = x.shape
    x0 = (w - tw) // 2
    y0 = (h - th) // 2
    return x[:, y0:y0 + th, x0:x0 + tw, :]


def tokenizer_forward(features_nchw, params):
    # NCHW -> NHWC, then reverse the feature list (deepest first)
    feats = [jnp.transpose(f, (0, 2, 3, 1)) for f in features_nchw][::-1]

    out = dense_block_apply(feats[0], params['bottle_neck'])       # last 16 channels
    for i in range(len(params['up'])):
        up = params['up'][i]
        skip = feats[i + 1].astype(jnp.bfloat16)
        if up['kind'] == 'up2':
            c = up['wt'].shape[1]
            t = conv_transpose3x3_s2(out, up['wt'],
                                     jnp.ones((c,), jnp.float32), up['bt'])
        else:   # scale == 4: ConvT(no bias) -> BN -> ConvT(bias)
            s, b = up['bn']
            t = conv_transpose3x3_s2(out, up['wt1'], s, b)
            c2 = up['wt2'].shape[1]
            t = conv_transpose3x3_s2(t, up['wt2'],
                                     jnp.ones((c2,), jnp.float32), up['bt2'])
        t = center_crop(t, skip.shape[1], skip.shape[2])
        hs = jnp.concatenate([t, skip], axis=-1)
        blk = params['dense'][i]
        if blk['kind'] == 'dense':
            out = dense_block_apply(hs, blk['layers'])
        else:
            out = double_conv_apply(hs, blk)
    return jnp.transpose(out, (0, 3, 1, 2)).astype(jnp.float32)     # back to NCHW


# -------------------------- pure-JAX references ------------------------------

def _conv3x3_ref(x, w_hwio):
    return jax.lax.conv_general_dilated(
        x.astype(jnp.bfloat16), w_hwio.astype(jnp.bfloat16), (1, 1), 'SAME',
        dimension_numbers=('NHWC', 'HWIO', 'NHWC'),
        preferred_element_type=jnp.float32)


def _dense_block_ref(x, layers):
    growth = layers[0]['w2'].shape[-1]
    cat = x.astype(jnp.bfloat16).astype(jnp.float32)
    for p in layers:
        s1, b1 = p['bn1']; s2, b2 = p['bn2']
        h = jnp.maximum(cat * s1 + b1, 0.0)
        h = jnp.einsum('nhwc,cd->nhwd', h.astype(jnp.bfloat16),
                       p['w1'].astype(jnp.bfloat16),
                       preferred_element_type=jnp.float32)
        h = jnp.maximum(h * s2 + b2, 0.0)
        cat = jnp.concatenate([cat, _conv3x3_ref(h, p['w2'])], axis=-1)
    return cat[..., -(len(layers) * growth):]


def _double_conv_ref(x, p):
    h = _conv3x3_ref(x.astype(jnp.bfloat16).astype(jnp.float32), p['w1'])
    h = jnp.maximum(h * p['bn1'][0] + p['bn1'][1], 0.0)
    h = _conv3x3_ref(h, p['w2'])
    return jnp.maximum(h * p['bn2'][0] + p['bn2'][1], 0.0)


def _conv_transpose_ref(x, w_t, bias):
    w = jnp.transpose(w_t[:, :, ::-1, ::-1], (2, 3, 0, 1))
    y = jax.lax.conv_general_dilated(
        x.astype(jnp.bfloat16), w.astype(jnp.bfloat16), (1, 1),
        [(2, 2), (2, 2)], lhs_dilation=(2, 2),
        dimension_numbers=('NHWC', 'HWIO', 'NHWC'),
        preferred_element_type=jnp.float32)
    return y + bias


# ------------------------------ param init ----------------------------------

class _KeyGen:
    def __init__(self, key):
        self.key = key

    def __call__(self):
        self.key, sub = jax.random.split(self.key)
        return sub


def _init_bn(key, c):
    k1, k2, k3, k4 = jax.random.split(key, 4)
    gamma = 1.0 + 0.1 * jax.random.normal(k1, (c,))
    beta = 0.1 * jax.random.normal(k2, (c,))
    mean = 0.1 * jax.random.normal(k3, (c,))
    var = 1.0 + 0.1 * jnp.abs(jax.random.normal(k4, (c,)))
    scale = gamma / jnp.sqrt(var + 1e-5)
    shift = beta - mean * scale
    return scale.astype(jnp.float32), shift.astype(jnp.float32)


def _init_w(key, shape):
    return (0.1 * jax.random.normal(key, shape)).astype(jnp.float32)


def init_params(key, hidden_dim):
    growth, bn_size = 4, 4
    block_config = [4, 4, 4, 4][::-1]
    backbone = [64, 128, 128][::-1]          # [128, 128, 64]
    kg = _KeyGen(key)

    def dense_block_params(num_layers, c_in):
        layers = []
        for l in range(num_layers):
            c = c_in + l * growth
            layers.append(dict(
                bn1=_init_bn(kg(), c),
                w1=_init_w(kg(), (c, bn_size * growth)),               # 1x1 conv
                bn2=_init_bn(kg(), bn_size * growth),
                w2=_init_w(kg(), (3, 3, bn_size * growth, growth)),    # 3x3 conv
            ))
        return layers

    params = dict(block_config=block_config, growth=growth)
    params['bottle_neck'] = dense_block_params(block_config[0], backbone[0])
    prev = growth * block_config[0]          # 16
    ups, dbs = [], []
    for i in range(len(backbone)):
        if i == len(backbone) - 1:
            ups.append(dict(kind='up4',
                            wt1=_init_w(kg(), (prev, hidden_dim, 3, 3)),
                            bn=_init_bn(kg(), hidden_dim),
                            wt2=_init_w(kg(), (hidden_dim, hidden_dim, 3, 3)),
                            bt2=_init_w(kg(), (hidden_dim,))))
            dbs.append(dict(kind='double',
                            w1=_init_w(kg(), (3, 3, hidden_dim + 3, hidden_dim)),
                            bn1=_init_bn(kg(), hidden_dim),
                            w2=_init_w(kg(), (3, 3, hidden_dim, hidden_dim)),
                            bn2=_init_bn(kg(), hidden_dim)))
        else:
            ups.append(dict(kind='up2',
                            wt=_init_w(kg(), (prev, prev, 3, 3)),
                            bt=_init_w(kg(), (prev,))))
            cur = prev + backbone[i + 1]
            dbs.append(dict(kind='dense',
                            layers=dense_block_params(block_config[i + 1], cur)))
            prev = growth * block_config[i + 1]
    params['up'] = ups
    params['dense'] = dbs
    return params


# ---------------------------------- main -------------------------------------

if __name__ == "__main__":
    key = jax.random.PRNGKey(0)
    k_feat, k_par, k_c1, k_c2, k_c3 = jax.random.split(key, 5)

    hidden_dim = 16                         # cfg.channel_dim
    params = init_params(k_par, hidden_dim)

    # --- unit checks of the fused Pallas kernels against bf16-matched XLA refs ---
    xc = jax.random.normal(k_c1, (2, 5, 6, 7), jnp.float32)
    wc = jax.random.normal(k_c2, (3, 3, 7, 4), jnp.float32)
    got = conv3x3_same(xc, wc, out_dtype=jnp.float32)
    ref = _conv3x3_ref(xc, wc)
    assert jnp.allclose(got, ref, atol=3e-2, rtol=3e-2), "conv3x3 mismatch"

    xt = jax.random.normal(k_c3, (2, 4, 4, 16), jnp.float32)
    up1 = params['up'][1]
    got = conv_transpose3x3_s2(xt, up1['wt'], jnp.ones((16,), jnp.float32),
                               up1['bt'], out_dtype=jnp.float32)
    ref = _conv_transpose_ref(xt, up1['wt'], up1['bt'])
    assert got.shape == (2, 9, 9, 16), got.shape
    assert jnp.allclose(got, ref, atol=3e-2, rtol=3e-2), "conv_transpose mismatch"

    # features in PyTorch order (shallowest -> deepest), NCHW:
    #   image (3ch), then backbone feats with channels [64, 128, 128]
    kf = jax.random.split(k_feat, 4)
    features = [
        jax.random.normal(kf[0], (2, 3, 32, 32), jnp.float32),
        jax.random.normal(kf[1], (2, 64, 8, 8), jnp.float32),
        jax.random.normal(kf[2], (2, 128, 4, 4), jnp.float32),
        jax.random.normal(kf[3], (2, 128, 2, 2), jnp.float32),
    ]

    # fused dense-block kernel check (real bottleneck shapes/params)
    f0 = jnp.transpose(features[3], (0, 2, 3, 1))              # (2, 2, 2, 128)
    got = dense_block_apply(f0, params['bottle_neck']).astype(jnp.float32)
    ref = _dense_block_ref(f0, params['bottle_neck'])
    assert jnp.allclose(got, ref, atol=3e-2, rtol=3e-2), "dense block mismatch"

    # fused double-conv kernel check (real final-stage shapes/params)
    xdc = jax.random.normal(kf[0], (2, 32, 32, hidden_dim + 3), jnp.float32)
    got = double_conv_apply(xdc, params['dense'][-1])
    ref = _double_conv_ref(xdc, params['dense'][-1])
    assert jnp.allclose(got, ref, atol=3e-2, rtol=3e-2), "double conv mismatch"

    # --- full forward ---
    forward = jax.jit(lambda feats: tokenizer_forward(feats, params))
    out = jax.block_until_ready(forward(features))

    assert out.shape == (2, hidden_dim, 32, 32), out.shape
    assert bool(jnp.all(jnp.isfinite(out)))
    print("KERNEL_OK")
</pallas_src>

<mosaic_0001>
module attributes {stable_mosaic.version = 11 : i64} {
  func.func @_conv3x3_kernel(%arg0: i32, %arg1: memref<1x7x8x7xbf16, #tpu.memory_space<vmem>>, %arg2: memref<63x4xbf16, #tpu.memory_space<vmem>>, %arg3: memref<1x4xf32, #tpu.memory_space<vmem>>, %arg4: memref<1x4xf32, #tpu.memory_space<vmem>>, %arg5: memref<1x5x6x4xf32, #tpu.memory_space<vmem>>) attributes {dimension_semantics = [#tpu.dimension_semantics<parallel>], iteration_bounds = array<i64: 2>, scalar_prefetch = 0 : i64, scratch_operands = 0 : i64, tpu.core_type = #tpu.core_type<tc>, window_params = [{transform_indices = @transform_0, window_bounds = array<i64: 1, 7, 8, 7>}, {pipeline_mode = #tpu.pipeline_mode<synchronous>, transform_indices = @transform_1, window_bounds = array<i64: 63, 4>}, {pipeline_mode = #tpu.pipeline_mode<synchronous>, transform_indices = @transform_2, window_bounds = array<i64: 1, 4>}, {pipeline_mode = #tpu.pipeline_mode<synchronous>, transform_indices = @transform_3, window_bounds = array<i64: 1, 4>}, {transform_indices = @transform_4, window_bounds = array<i64: 1, 5, 6, 4>}]} {
    %c0 = arith.constant 0 : index
    %c0_0 = arith.constant 0 : index
    %0 = vector.load %arg2[%c0, %c0_0] : memref<63x4xbf16, #tpu.memory_space<vmem>>, vector<63x4xbf16>
    %c0_1 = arith.constant 0 : index
    %c0_2 = arith.constant 0 : index
    %1 = vector.load %arg3[%c0_1, %c0_2] : memref<1x4xf32, #tpu.memory_space<vmem>>, vector<1x4xf32>
    %c0_3 = arith.constant 0 : index
    %c0_4 = arith.constant 0 : index
    %2 = vector.load %arg4[%c0_3, %c0_4] : memref<1x4xf32, #tpu.memory_space<vmem>>, vector<1x4xf32>
    %c0_5 = arith.constant 0 : index
    %c0_6 = arith.constant 0 : index
    %c0_7 = arith.constant 0 : index
    %c0_8 = arith.constant 0 : index
    %3 = vector.load %arg1[%c0_5, %c0_6, %c0_7, %c0_8] : memref<1x7x8x7xbf16, #tpu.memory_space<vmem>>, vector<1x1x8x7xbf16>
    %4 = vector.shape_cast %3 : vector<1x1x8x7xbf16> to vector<8x7xbf16>
    %5 = vector.extract_strided_slice %4 {offsets = [0, 0], sizes = [6, 7], strides = [1, 1]} : vector<8x7xbf16> to vector<6x7xbf16>
    %6 = vector.extract_strided_slice %4 {offsets = [1, 0], sizes = [6, 7], strides = [1, 1]} : vector<8x7xbf16> to vector<6x7xbf16>
    %7 = vector.extract_strided_slice %4 {offsets = [2, 0], sizes = [6, 7], strides = [1, 1]} : vector<8x7xbf16> to vector<6x7xbf16>
    %c0_9 = arith.constant 0 : index
    %c1 = arith.constant 1 : index
    %c0_10 = arith.constant 0 : index
    %c0_11 = arith.constant 0 : index
    %8 = vector.load %arg1[%c0_9, %c1, %c0_10, %c0_11] : memref<1x7x8x7xbf16, #tpu.memory_space<vmem>>, vector<1x1x8x7xbf16>
    %9 = vector.shape_cast %8 : vector<1x1x8x7xbf16> to vector<8x7xbf16>
    %10 = vector.extract_strided_slice %9 {offsets = [0, 0], sizes = [6, 7], strides = [1, 1]} : vector<8x7xbf16> to vector<6x7xbf16>
    %11 = vector.extract_strided_slice %9 {offsets = [1, 0], sizes = [6, 7], strides = [1, 1]} : vector<8x7xbf16> to vector<6x7xbf16>
    %12 = vector.extract_strided_slice %9 {offsets = [2, 0], sizes = [6, 7], strides = [1, 1]} : vector<8x7xbf16> to vector<6x7xbf16>
    %c0_12 = arith.constant 0 : index
    %c2 = arith.constant 2 : index
    %c0_13 = arith.constant 0 : index
    %c0_14 = arith.constant 0 : index
    %13 = vector.load %arg1[%c0_12, %c2, %c0_13, %c0_14] : memref<1x7x8x7xbf16, #tpu.memory_space<vmem>>, vector<1x1x8x7xbf16>
    %14 = vector.shape_cast %13 : vector<1x1x8x7xbf16> to vector<8x7xbf16>
    %15 = vector.extract_strided_slice %14 {offsets = [0, 0], sizes = [6, 7], strides = [1, 1]} : vector<8x7xbf16> to vector<6x7xbf16>
    %16 = vector.extract_strided_slice %14 {offsets = [1, 0], sizes = [6, 7], strides = [1, 1]} : vector<8x7xbf16> to vector<6x7xbf16>
    %17 = vector.extract_strided_slice %14 {offsets = [2, 0], sizes = [6, 7], strides = [1, 1]} : vector<8x7xbf16> to vector<6x7xbf16>
    %18 = tpu.concatenate %5, %6, %7, %10, %11, %12, %15, %16, %17 in 1 : vector<6x7xbf16>, vector<6x7xbf16>, vector<6x7xbf16>, vector<6x7xbf16>, vector<6x7xbf16>, vector<6x7xbf16>, vector<6x7xbf16>, vector<6x7xbf16>, vector<6x7xbf16> -> vector<6x63xbf16>
    %c0_15 = arith.constant 0 : index
    %c1_16 = arith.constant 1 : index
    %c0_17 = arith.constant 0 : index
    %c0_18 = arith.constant 0 : index
    %19 = vector.load %arg1[%c0_15, %c1_16, %c0_17, %c0_18] : memref<1x7x8x7xbf16, #tpu.memory_space<vmem>>, vector<1x1x8x7xbf16>
    %20 = vector.shape_cast %19 : vector<1x1x8x7xbf16> to vector<8x7xbf16>
    %21 = vector.extract_strided_slice %20 {offsets = [0, 0], sizes = [6, 7], strides = [1, 1]} : vector<8x7xbf16> to vector<6x7xbf16>
    %22 = vector.extract_strided_slice %20 {offsets = [1, 0], sizes = [6, 7], strides = [1, 1]} : vector<8x7xbf16> to vector<6x7xbf16>
    %23 = vector.extract_strided_slice %20 {offsets = [2, 0], sizes = [6, 7], strides = [1, 1]} : vector<8x7xbf16> to vector<6x7xbf16>
    %c0_19 = arith.constant 0 : index
    %c2_20 = arith.constant 2 : index
    %c0_21 = arith.constant 0 : index
    %c0_22 = arith.constant 0 : index
    %24 = vector.load %arg1[%c0_19, %c2_20, %c0_21, %c0_22] : memref<1x7x8x7xbf16, #tpu.memory_space<vmem>>, vector<1x1x8x7xbf16>
    %25 = vector.shape_cast %24 : vector<1x1x8x7xbf16> to vector<8x7xbf16>
    %26 = vector.extract_strided_slice %25 {offsets = [0, 0], sizes = [6, 7], strides = [1, 1]} : vector<8x7xbf16> to vector<6x7xbf16>
    %27 = vector.extract_strided_slice %25 {offsets = [1, 0], sizes = [6, 7], strides = [1, 1]} : vector<8x7xbf16> to vector<6x7xbf16>
    %28 = vector.extract_strided_slice %25 {offsets = [2, 0], sizes = [6, 7], strides = [1, 1]} : vector<8x7xbf16> to vector<6x7xbf16>
    %c0_23 = arith.constant 0 : index
    %c3 = arith.constant 3 : index
    %c0_24 = arith.constant 0 : index
    %c0_25 = arith.constant 0 : index
    %29 = vector.load %arg1[%c0_23, %c3, %c0_24, %c0_25] : memref<1x7x8x7xbf16, #tpu.memory_space<vmem>>, vector<1x1x8x7xbf16>
    %30 = vector.shape_cast %29 : vector<1x1x8x7xbf16> to vector<8x7xbf16>
    %31 = vector.extract_strided_slice %30 {offsets = [0, 0], sizes = [6, 7], strides = [1, 1]} : vector<8x7xbf16> to vector<6x7xbf16>
    %32 = vector.extract_strided_slice %30 {offsets = [1, 0], sizes = [6, 7], strides = [1, 1]} : vector<8x7xbf16> to vector<6x7xbf16>
    %33 = vector.extract_strided_slice %30 {offsets = [2, 0], sizes = [6, 7], strides = [1, 1]} : vector<8x7xbf16> to vector<6x7xbf16>
    %34 = tpu.concatenate %21, %22, %23, %26, %27, %28, %31, %32, %33 in 1 : vector<6x7xbf16>, vector<6x7xbf16>, vector<6x7xbf16>, vector<6x7xbf16>, vector<6x7xbf16>, vector<6x7xbf16>, vector<6x7xbf16>, vector<6x7xbf16>, vector<6x7xbf16> -> vector<6x63xbf16>
    %c0_26 = arith.constant 0 : index
    %c2_27 = arith.constant 2 : index
    %c0_28 = arith.constant 0 : index
    %c0_29 = arith.constant 0 : index
    %35 = vector.load %arg1[%c0_26, %c2_27, %c0_28, %c0_29] : memref<1x7x8x7xbf16, #tpu.memory_space<vmem>>, vector<1x1x8x7xbf16>
    %36 = vector.shape_cast %35 : vector<1x1x8x7xbf16> to vector<8x7xbf16>
    %37 = vector.extract_strided_slice %36 {offsets = [0, 0], sizes = [6, 7], strides = [1, 1]} : vector<8x7xbf16> to vector<6x7xbf16>
    %38 = vector.extract_strided_slice %36 {offsets = [1, 0], sizes = [6, 7], strides = [1, 1]} : vector<8x7xbf16> to vector<6x7xbf16>
    %39 = vector.extract_strided_slice %36 {offsets = [2, 0], sizes = [6, 7], strides = [1, 1]} : vector<8x7xbf16> to vector<6x7xbf16>
    %c0_30 = arith.constant 0 : index
    %c3_31 = arith.constant 3 : index
    %c0_32 = arith.constant 0 : index
    %c0_33 = arith.constant 0 : index
    %40 = vector.load %arg1[%c0_30, %c3_31, %c0_32, %c0_33] : memref<1x7x8x7xbf16, #tpu.memory_space<vmem>>, vector<1x1x8x7xbf16>
    %41 = vector.shape_cast %40 : vector<1x1x8x7xbf16> to vector<8x7xbf16>
    %42 = vector.extract_strided_slice %41 {offsets = [0, 0], sizes = [6, 7], strides = [1, 1]} : vector<8x7xbf16> to vector<6x7xbf16>
    %43 = vector.extract_strided_slice %41 {offsets = [1, 0], sizes = [6, 7], strides = [1, 1]} : vector<8x7xbf16> to vector<6x7xbf16>
    %44 = vector.extract_strided_slice %41 {offsets = [2, 0], sizes = [6, 7], strides = [1, 1]} : vector<8x7xbf16> to vector<6x7xbf16>
    %c0_34 = arith.constant 0 : index
    %c4 = arith.constant 4 : index
    %c0_35 = arith.constant 0 : index
    %c0_36 = arith.constant 0 : index
    %45 = vector.load %arg1[%c0_34, %c4, %c0_35, %c0_36] : memref<1x7x8x7xbf16, #tpu.memory_space<vmem>>, vector<1x1x8x7xbf16>
    %46 = vector.shape_cast %45 : vector<1x1x8x7xbf16> to vector<8x7xbf16>
    %47 = vector.extract_strided_slice %46 {offsets = [0, 0], sizes = [6, 7], strides = [1, 1]} : vector<8x7xbf16> to vector<6x7xbf16>
    %48 = vector.extract_strided_slice %46 {offsets = [1, 0], sizes = [6, 7], strides = [1, 1]} : vector<8x7xbf16> to vector<6x7xbf16>
    %49 = vector.extract_strided_slice %46 {offsets = [2, 0], sizes = [6, 7], strides = [1, 1]} : vector<8x7xbf16> to vector<6x7xbf16>
    %50 = tpu.concatenate %37, %38, %39, %42, %43, %44, %47, %48, %49 in 1 : vector<6x7xbf16>, vector<6x7xbf16>, vector<6x7xbf16>, vector<6x7xbf16>, vector<6x7xbf16>, vector<6x7xbf16>, vector<6x7xbf16>, vector<6x7xbf16>, vector<6x7xbf16> -> vector<6x63xbf16>
    %c0_37 = arith.constant 0 : index
    %c3_38 = arith.constant 3 : index
    %c0_39 = arith.constant 0 : index
    %c0_40 = arith.constant 0 : index
    %51 = vector.load %arg1[%c0_37, %c3_38, %c0_39, %c0_40] : memref<1x7x8x7xbf16, #tpu.memory_space<vmem>>, vector<1x1x8x7xbf16>
    %52 = vector.shape_cast %51 : vector<1x1x8x7xbf16> to vector<8x7xbf16>
    %53 = vector.extract_strided_slice %52 {offsets = [0, 0], sizes = [6, 7], strides = [1, 1]} : vector<8x7xbf16> to vector<6x7xbf16>
    %54 = vector.extract_strided_slice %52 {offsets = [1, 0], sizes = [6, 7], strides = [1, 1]} : vector<8x7xbf16> to vector<6x7xbf16>
    %55 = vector.extract_strided_slice %52 {offsets = [2, 0], sizes = [6, 7], strides = [1, 1]} : vector<8x7xbf16> to vector<6x7xbf16>
    %c0_41 = arith.constant 0 : index
    %c4_42 = arith.constant 4 : index
    %c0_43 = arith.constant 0 : index
    %c0_44 = arith.constant 0 : index
    %56 = vector.load %arg1[%c0_41, %c4_42, %c0_43, %c0_44] : memref<1x7x8x7xbf16, #tpu.memory_space<vmem>>, vector<1x1x8x7xbf16>
    %57 = vector.shape_cast %56 : vector<1x1x8x7xbf16> to vector<8x7xbf16>
    %58 = vector.extract_strided_slice %57 {offsets = [0, 0], sizes = [6, 7], strides = [1, 1]} : vector<8x7xbf16> to vector<6x7xbf16>
    %59 = vector.extract_strided_slice %57 {offsets = [1, 0], sizes = [6, 7], strides = [1, 1]} : vector<8x7xbf16> to vector<6x7xbf16>
    %60 = vector.extract_strided_slice %57 {offsets = [2, 0], sizes = [6, 7], strides = [1, 1]} : vector<8x7xbf16> to vector<6x7xbf16>
    %c0_45 = arith.constant 0 : index
    %c5 = arith.constant 5 : index
    %c0_46 = arith.constant 0 : index
    %c0_47 = arith.constant 0 : index
    %61 = vector.load %arg1[%c0_45, %c5, %c0_46, %c0_47] : memref<1x7x8x7xbf16, #tpu.memory_space<vmem>>, vector<1x1x8x7xbf16>
    %62 = vector.shape_cast %61 : vector<1x1x8x7xbf16> to vector<8x7xbf16>
    %63 = vector.extract_strided_slice %62 {offsets = [0, 0], sizes = [6, 7], strides = [1, 1]} : vector<8x7xbf16> to vector<6x7xbf16>
    %64 = vector.extract_strided_slice %62 {offsets = [1, 0], sizes = [6, 7], strides = [1, 1]} : vector<8x7xbf16> to vector<6x7xbf16>
    %65 = vector.extract_strided_slice %62 {offsets = [2, 0], sizes = [6, 7], strides = [1, 1]} : vector<8x7xbf16> to vector<6x7xbf16>
    %66 = tpu.concatenate %53, %54, %55, %58, %59, %60, %63, %64, %65 in 1 : vector<6x7xbf16>, vector<6x7xbf16>, vector<6x7xbf16>, vector<6x7xbf16>, vector<6x7xbf16>, vector<6x7xbf16>, vector<6x7xbf16>, vector<6x7xbf16>, vector<6x7xbf16> -> vector<6x63xbf16>
    %c0_48 = arith.constant 0 : index
    %c4_49 = arith.constant 4 : index
    %c0_50 = arith.constant 0 : index
    %c0_51 = arith.constant 0 : index
    %67 = vector.load %arg1[%c0_48, %c4_49, %c0_50, %c0_51] : memref<1x7x8x7xbf16, #tpu.memory_space<vmem>>, vector<1x1x8x7xbf16>
    %68 = vector.shape_cast %67 : vector<1x1x8x7xbf16> to vector<8x7xbf16>
    %69 = vector.extract_strided_slice %68 {offsets = [0, 0], sizes = [6, 7], strides = [1, 1]} : vector<8x7xbf16> to vector<6x7xbf16>
    %70 = vector.extract_strided_slice %68 {offsets = [1, 0], sizes = [6, 7], strides = [1, 1]} : vector<8x7xbf16> to vector<6x7xbf16>
    %71 = vector.extract_strided_slice %68 {offsets = [2, 0], sizes = [6, 7], strides = [1, 1]} : vector<8x7xbf16> to vector<6x7xbf16>
    %c0_52 = arith.constant 0 : index
    %c5_53 = arith.constant 5 : index
    %c0_54 = arith.constant 0 : index
    %c0_55 = arith.constant 0 : index
    %72 = vector.load %arg1[%c0_52, %c5_53, %c0_54, %c0_55] : memref<1x7x8x7xbf16, #tpu.memory_space<vmem>>, vector<1x1x8x7xbf16>
    %73 = vector.shape_cast %72 : vector<1x1x8x7xbf16> to vector<8x7xbf16>
    %74 = vector.extract_strided_slice %73 {offsets = [0, 0], sizes = [6, 7], strides = [1, 1]} : vector<8x7xbf16> to vector<6x7xbf16>
    %75 = vector.extract_strided_slice %73 {offsets = [1, 0], sizes = [6, 7], strides = [1, 1]} : vector<8x7xbf16> to vector<6x7xbf16>
    %76 = vector.extract_strided_slice %73 {offsets = [2, 0], sizes = [6, 7], strides = [1, 1]} : vector<8x7xbf16> to vector<6x7xbf16>
    %c0_56 = arith.constant 0 : index
    %c6 = arith.constant 6 : index
    %c0_57 = arith.constant 0 : index
    %c0_58 = arith.constant 0 : index
    %77 = vector.load %arg1[%c0_56, %c6, %c0_57, %c0_58] : memref<1x7x8x7xbf16, #tpu.memory_space<vmem>>, vector<1x1x8x7xbf16>
    %78 = vector.shape_cast %77 : vector<1x1x8x7xbf16> to vector<8x7xbf16>
    %79 = vector.extract_strided_slice %78 {offsets = [0, 0], sizes = [6, 7], strides = [1, 1]} : vector<8x7xbf16> to vector<6x7xbf16>
    %80 = vector.extract_strided_slice %78 {offsets = [1, 0], sizes = [6, 7], strides = [1, 1]} : vector<8x7xbf16> to vector<6x7xbf16>
    %81 = vector.extract_strided_slice %78 {offsets = [2, 0], sizes = [6, 7], strides = [1, 1]} : vector<8x7xbf16> to vector<6x7xbf16>
    %82 = tpu.concatenate %69, %70, %71, %74, %75, %76, %79, %80, %81 in 1 : vector<6x7xbf16>, vector<6x7xbf16>, vector<6x7xbf16>, vector<6x7xbf16>, vector<6x7xbf16>, vector<6x7xbf16>, vector<6x7xbf16>, vector<6x7xbf16>, vector<6x7xbf16> -> vector<6x63xbf16>
    %83 = tpu.concatenate %18, %34, %50, %66, %82 in 0 : vector<6x63xbf16>, vector<6x63xbf16>, vector<6x63xbf16>, vector<6x63xbf16>, vector<6x63xbf16> -> vector<30x63xbf16>
    %cst = arith.constant dense<0.000000e+00> : vector<30x4xf32>
    %84 = tpu.matmul %83, %0, %cst {dimension_numbers = #tpu.dot_dimension_numbers<[1], [0], [0], [1], [0, 0, 1, 1], [], []>} : vector<30x63xbf16>, vector<63x4xbf16>, vector<30x4xf32> -> vector<30x4xf32>
    %85 = vector.broadcast %1 : vector<1x4xf32> to vector<30x4xf32>
    %86 = arith.mulf %84, %85 : vector<30x4xf32>
    %87 = vector.broadcast %2 : vector<1x4xf32> to vector<30x4xf32>
    %88 = arith.addf %86, %87 : vector<30x4xf32>
    %89 = vector.extract_strided_slice %88 {offsets = [0, 0], sizes = [6, 4], strides = [1, 1]} : vector<30x4xf32> to vector<6x4xf32>
    %c0_59 = arith.constant 0 : index
    %c0_60 = arith.constant 0 : index
    %c0_61 = arith.constant 0 : index
    %c0_62 = arith.constant 0 : index
    %90 = vector.load %arg5[%c0_59, %c0_60, %c0_61, %c0_62] : memref<1x5x6x4xf32, #tpu.memory_space<vmem>>, vector<1x1x6x4xf32>
    %91 = vector.shape_cast %90 : vector<1x1x6x4xf32> to vector<6x4xf32>
    %92 = vector.shape_cast %89 : vector<6x4xf32> to vector<1x1x6x4xf32>
    tpu.vector_store %arg5[%c0_59, %c0_60, %c0_61, %c0_62], %92 {strides = array<i32>} : memref<1x5x6x4xf32, #tpu.memory_space<vmem>>, vector<1x1x6x4xf32>,
    %93 = vector.extract_strided_slice %88 {offsets = [6, 0], sizes = [6, 4], strides = [1, 1]} : vector<30x4xf32> to vector<6x4xf32>
    %c0_63 = arith.constant 0 : index
    %c1_64 = arith.constant 1 : index
    %c0_65 = arith.constant 0 : index
    %c0_66 = arith.constant 0 : index
    %94 = vector.load %arg5[%c0_63, %c1_64, %c0_65, %c0_66] : memref<1x5x6x4xf32, #tpu.memory_space<vmem>>, vector<1x1x6x4xf32>
    %95 = vector.shape_cast %94 : vector<1x1x6x4xf32> to vector<6x4xf32>
    %96 = vector.shape_cast %93 : vector<6x4xf32> to vector<1x1x6x4xf32>
    tpu.vector_store %arg5[%c0_63, %c1_64, %c0_65, %c0_66], %96 {strides = array<i32>} : memref<1x5x6x4xf32, #tpu.memory_space<vmem>>, vector<1x1x6x4xf32>,
    %97 = vector.extract_strided_slice %88 {offsets = [12, 0], sizes = [6, 4], strides = [1, 1]} : vector<30x4xf32> to vector<6x4xf32>
    %c0_67 = arith.constant 0 : index
    %c2_68 = arith.constant 2 : index
    %c0_69 = arith.constant 0 : index
    %c0_70 = arith.constant 0 : index
    %98 = vector.load %arg5[%c0_67, %c2_68, %c0_69, %c0_70] : memref<1x5x6x4xf32, #tpu.memory_space<vmem>>, vector<1x1x6x4xf32>
    %99 = vector.shape_cast %98 : vector<1x1x6x4xf32> to vector<6x4xf32>
    %100 = vector.shape_cast %97 : vector<6x4xf32> to vector<1x1x6x4xf32>
    tpu.vector_store %arg5[%c0_67, %c2_68, %c0_69, %c0_70], %100 {strides = array<i32>} : memref<1x5x6x4xf32, #tpu.memory_space<vmem>>, vector<1x1x6x4xf32>,
    %101 = vector.extract_strided_slice %88 {offsets = [18, 0], sizes = [6, 4], strides = [1, 1]} : vector<30x4xf32> to vector<6x4xf32>
    %c0_71 = arith.constant 0 : index
    %c3_72 = arith.constant 3 : index
    %c0_73 = arith.constant 0 : index
    %c0_74 = arith.constant 0 : index
    %102 = vector.load %arg5[%c0_71, %c3_72, %c0_73, %c0_74] : memref<1x5x6x4xf32, #tpu.memory_space<vmem>>, vector<1x1x6x4xf32>
    %103 = vector.shape_cast %102 : vector<1x1x6x4xf32> to vector<6x4xf32>
    %104 = vector.shape_cast %101 : vector<6x4xf32> to vector<1x1x6x4xf32>
    tpu.vector_store %arg5[%c0_71, %c3_72, %c0_73, %c0_74], %104 {strides = array<i32>} : memref<1x5x6x4xf32, #tpu.memory_space<vmem>>, vector<1x1x6x4xf32>,
    %105 = vector.extract_strided_slice %88 {offsets = [24, 0], sizes = [6, 4], strides = [1, 1]} : vector<30x4xf32> to vector<6x4xf32>
    %c0_75 = arith.constant 0 : index
    %c4_76 = arith.constant 4 : index
    %c0_77 = arith.constant 0 : index
    %c0_78 = arith.constant 0 : index
    %106 = vector.load %arg5[%c0_75, %c4_76, %c0_77, %c0_78] : memref<1x5x6x4xf32, #tpu.memory_space<vmem>>, vector<1x1x6x4xf32>
    %107 = vector.shape_cast %106 : vector<1x1x6x4xf32> to vector<6x4xf32>
    %108 = vector.shape_cast %105 : vector<6x4xf32> to vector<1x1x6x4xf32>
    tpu.vector_store %arg5[%c0_75, %c4_76, %c0_77, %c0_78], %108 {strides = array<i32>} : memref<1x5x6x4xf32, #tpu.memory_space<vmem>>, vector<1x1x6x4xf32>,
    return
  }
  func.func @transform_0(%arg0: i32) -> (i32, i32, i32, i32) {
    %c0_i32 = arith.constant 0 : i32
    %c0_i32_0 = arith.constant 0 : i32
    %c0_i32_1 = arith.constant 0 : i32
    %c0_i32_2 = arith.constant 0 : i32
    return %arg0, %c0_i32, %c0_i32_0, %c0_i32_1 : i32, i32, i32, i32
  }
  func.func @transform_1(%arg0: i32) -> (i32, i32) {
    %c0_i32 = arith.constant 0 : i32
    %c0_i32_0 = arith.constant 0 : i32
    %c0_i32_1 = arith.constant 0 : i32
    return %c0_i32, %c0_i32_0 : i32, i32
  }
  func.func @transform_2(%arg0: i32) -> (i32, i32) {
    %c0_i32 = arith.constant 0 : i32
    %c0_i32_0 = arith.constant 0 : i32
    %c0_i32_1 = arith.constant 0 : i32
    return %c0_i32, %c0_i32_0 : i32, i32
  }
  func.func @transform_3(%arg0: i32) -> (i32, i32) {
    %c0_i32 = arith.constant 0 : i32
    %c0_i32_0 = arith.constant 0 : i32
    %c0_i32_1 = arith.constant 0 : i32
    return %c0_i32, %c0_i32_0 : i32, i32
  }
  func.func @transform_4(%arg0: i32) -> (i32, i32, i32, i32) {
    %c0_i32 = arith.constant 0 : i32
    %c0_i32_0 = arith.constant 0 : i32
    %c0_i32_1 = arith.constant 0 : i32
    %c0_i32_2 = arith.constant 0 : i32
    return %arg0, %c0_i32, %c0_i32_0, %c0_i32_1 : i32, i32, i32, i32
  }
}

</mosaic_0001>

<llo_original>
// kernel: tpu_custom_call.1
$region0: #{tpu_custom_call.1}
  #allocation0 [shape = 'u32[]', space=smem, size = 0x4, offset = 0x4, fixed_abs, tag = 'smem constant byte address 0x4 - core index']
  #allocation1 [shape = 'u32[144,128]{1,0:T(1,128)}', space=vmem, size = 0x12000, scoped, tag = 'internal scratch']
  %s0 = inlined_call_operand.vmem [shape: bf16[2,7,8,7], index: 0, kind: input, shape index: {}]
  %s1 = inlined_call_operand.vmem [shape: bf16[63,4], index: 1, kind: input, shape index: {}]
  %s2 = inlined_call_operand.vmem [shape: f32[1,4], index: 2, kind: input, shape index: {}]
  %s3 = inlined_call_operand.vmem [shape: f32[1,4], index: 3, kind: input, shape index: {}]
  %s4 = inlined_call_operand.vmem [shape: f32[2,5,6,4], index: 4, kind: output, shape index: {}]
  %s5 = sld [smem:[#allocation0]]
  $region49: #{tpu_custom_call.1} parent=0
    _
  %s7 = ssub.s32 1, %s5
  %s8 = scalar_select 0, %s7, %s5
  loop: start=0, step=1, limit=4
  $region2: #{tpu_custom_call.1} parent=0 // loop_pre_header
    _
  $region3: #{tpu_custom_call.1} parent=0 // loop_header
    %s10 = sphi 0, %s14
    %p11 = scmp.ge.s32.totalorder %s10, 4
    %s20 = sphi 0, %s22
    %s23 = sphi 0, %s20
    %s24 = sphi 0, %s23
    %s40 = sphi 0, %s24
    %s44 = sphi 0, %s44
    %s46 = sphi 0, %s44
    %s47 = sphi 0, %s46
    %s61 = sphi 0, %s47
    %s65 = sphi 0, %s65
    %s67 = sphi 0, %s65
    %s68 = sphi 0, %s67
    %s82 = sphi 0, %s68
    %s86 = sphi 0, %s86
    %s88 = sphi 0, %s86
    %s89 = sphi 0, %s88
    %s103 = sphi 0, %s89
    %s109 = sphi 0, %s111
    %s112 = sphi 0, %s109
    %s113 = sphi 0, %s112
    %s129 = sphi 0, %s113
  $region4: #{tpu_custom_call.1} parent=0 // loop_header_branch
    %13 = sbr.rel (%p11) target = $region8
  $region5: #{tpu_custom_call.1} parent=0 // loop_body
    %s15 = ssub.s32 %s10, 1
    %s16 = ssub.s32 %s10, 2
    %s17 = sadd.s32 %s10, 1
    %s18 = ssub.s32 %s10, %s17
    %p19 = scmp.eq.s32.totalorder %s18, 0
    %s21 = sadd.s32 %s20, 1
    %s22 = scalar_select %p19, %s20, %s21
    %p25 = pneg %p19
    %p26 = scmp.eq.s32.totalorder %s10, 1
    %p27 = por %p25, %p26
    %p28 = scmp.ne.s32.totalorder %s20, %s23
    %p29 = scmp.eq.s32.totalorder %s10, 0
    %p30 = por %p28, %p29
    %p31 = scmp.ne.s32.totalorder %s20, %s23
    %p32 = scmp.eq.s32.totalorder %s15, 1
    %p33 = por %p31, %p32
    %p34 = scmp.ne.s32.totalorder %s23, %s24
    %p35 = scmp.eq.s32.totalorder %s15, 0
    %p36 = por %p34, %p35
    %p37 = scmp.ne.s32.totalorder %s23, %s24
    %p38 = scmp.eq.s32.totalorder %s16, 1
    %p39 = por %p37, %p38
    %p41 = scmp.ne.s32.totalorder %s24, %s40
    %p42 = scmp.eq.s32.totalorder %s16, 0
    %p43 = por %p41, %p42
    %s45 = sadd.s32 %s44, 1
    %p48 = scmp.eq.s32.totalorder %s10, 1
    %p49 = scmp.ne.s32.totalorder %s44, %s46
    %p50 = scmp.eq.s32.totalorder %s10, 0
    %p51 = por %p49, %p50
    %p52 = scmp.ne.s32.totalorder %s44, %s46
    %p53 = scmp.eq.s32.totalorder %s15, 1
    %p54 = por %p52, %p53
    %p55 = scmp.ne.s32.totalorder %s46, %s47
    %p56 = scmp.eq.s32.totalorder %s15, 0
    %p57 = por %p55, %p56
    %p58 = scmp.ne.s32.totalorder %s46, %s47
    %p59 = scmp.eq.s32.totalorder %s16, 1
    %p60 = por %p58, %p59
    %p62 = scmp.ne.s32.totalorder %s47, %s61
    %p63 = scmp.eq.s32.totalorder %s16, 0
    %p64 = por %p62, %p63
    %s66 = sadd.s32 %s65, 1
    %p69 = scmp.eq.s32.totalorder %s10, 1
    %p70 = scmp.ne.s32.totalorder %s65, %s67
    %p71 = scmp.eq.s32.totalorder %s10, 0
    %p72 = por %p70, %p71
    %p73 = scmp.ne.s32.totalorder %s65, %s67
    %p74 = scmp.eq.s32.totalorder %s15, 1
    %p75 = por %p73, %p74
    %p76 = scmp.ne.s32.totalorder %s67, %s68
    %p77 = scmp.eq.s32.totalorder %s15, 0
    %p78 = por %p76, %p77
    %p79 = scmp.ne.s32.totalorder %s67, %s68
    %p80 = scmp.eq.s32.totalorder %s16, 1
    %p81 = por %p79, %p80
    %p83 = scmp.ne.s32.totalorder %s68, %s82
    %p84 = scmp.eq.s32.totalorder %s16, 0
    %p85 = por %p83, %p84
    %s87 = sadd.s32 %s86, 1
    %p90 = scmp.eq.s32.totalorder %s10, 1
    %p91 = scmp.ne.s32.totalorder %s86, %s88
    %p92 = scmp.eq.s32.totalorder %s10, 0
    %p93 = por %p91, %p92
    %p94 = scmp.ne.s32.totalorder %s86, %s88
    %p95 = scmp.eq.s32.totalorder %s15, 1
    %p96 = por %p94, %p95
    %p97 = scmp.ne.s32.totalorder %s88, %s89
    %p98 = scmp.eq.s32.totalorder %s15, 0
    %p99 = por %p97, %p98
    %p100 = scmp.ne.s32.totalorder %s88, %s89
    %p101 = scmp.eq.s32.totalorder %s16, 1
    %p102 = por %p100, %p101
    %p104 = scmp.ne.s32.totalorder %s89, %s103
    %p105 = scmp.eq.s32.totalorder %s16, 0
    %p106 = por %p104, %p105
    %s107 = ssub.s32 %s10, %s17
    %p108 = scmp.eq.s32.totalorder %s107, 0
    %s110 = sadd.s32 %s109, 1
    %s111 = scalar_select %p108, %s109, %s110
    %p114 = pneg %p108
    %p115 = scmp.eq.s32.totalorder %s10, 1
    %p116 = por %p114, %p115
    %p117 = scmp.ne.s32.totalorder %s109, %s112
    %p118 = scmp.eq.s32.totalorder %s10, 0
    %p119 = por %p117, %p118
    %p120 = scmp.ne.s32.totalorder %s109, %s112
    %p121 = scmp.eq.s32.totalorder %s15, 1
    %p122 = por %p120, %p121
    %p123 = scmp.ne.s32.totalorder %s112, %s113
    %p124 = scmp.eq.s32.totalorder %s15, 0
    %p125 = por %p123, %p124
    %p126 = scmp.ne.s32.totalorder %s112, %s113
    %p127 = scmp.eq.s32.totalorder %s16, 1
    %p128 = por %p126, %p127
    %p130 = scmp.ne.s32.totalorder %s113, %s129
    %p131 = scmp.eq.s32.totalorder %s16, 0
    %p132 = por %p130, %p131
    %p133 = scmp.le.s32.totalorder 1, %s10
    %p134 = scmp.lt.s32.totalorder %s10, 3
    %p135 = pnand %p133, %p134
    %p136 = pneg %p135
    // Predicated region
    $region9: #{tpu_custom_call.1} parent=5 // pred_check
      _
    $region10: #{tpu_custom_call.1} parent=5 // pred_check_branch
      %138 = sbr.rel (%p135) target = $region12
    $region11: #{tpu_custom_call.1} parent=5 // pred_region
      %s139 = ssub.s32 %s10, 1
      // Predicated region
      $region13: #{tpu_custom_call.1} parent=11 // pred_check
        %p140 = pneg %p57
      $region14: #{tpu_custom_call.1} parent=11 // pred_check_branch
        %142 = sbr.rel (%p140) target = $region16
      $region15: #{tpu_custom_call.1} parent=11 // pred_region
        _
      $region16: #{tpu_custom_call.1} parent=11 // pred_fallthru
        _
      // Predicated region
      $region17: #{tpu_custom_call.1} parent=11 // pred_check
        %p143 = pneg %p78
      $region18: #{tpu_custom_call.1} parent=11 // pred_check_branch
        %145 = sbr.rel (%p143) target = $region20
      $region19: #{tpu_custom_call.1} parent=11 // pred_region
        _
      $region20: #{tpu_custom_call.1} parent=11 // pred_fallthru
        _
      // Predicated region
      $region21: #{tpu_custom_call.1} parent=11 // pred_check
        %p146 = pneg %p99
      $region22: #{tpu_custom_call.1} parent=11 // pred_check_branch
        %148 = sbr.rel (%p146) target = $region24
      $region23: #{tpu_custom_call.1} parent=11 // pred_region
        _
      $region24: #{tpu_custom_call.1} parent=11 // pred_fallthru
        _
    $region12: #{tpu_custom_call.1} parent=5 // pred_fallthru
      _
    %p149 = scmp.lt.s32.totalorder %s10, 2
    // Predicated region
    $region25: #{tpu_custom_call.1} parent=5 // pred_check
      %p150 = pneg %p149
    $region26: #{tpu_custom_call.1} parent=5 // pred_check_branch
      %152 = sbr.rel (%p150) target = $region28
    $region27: #{tpu_custom_call.1} parent=5 // pred_region
      // Predicated region
      $region29: #{tpu_custom_call.1} parent=27 // pred_check
        %p153 = pneg %p30
      $region30: #{tpu_custom_call.1} parent=27 // pred_check_branch
        %155 = sbr.rel (%p153) target = $region32
      $region31: #{tpu_custom_call.1} parent=27 // pred_region
        %p156 = scmp.lt.s32.totalorder %s10, 1
        %s157 = scalar_select %p156, %s10, 1
        %s158 = smul.addr %s157, 7
        %s159 = smul.addr %s158, 4
        %s160 = scalar_lea.vmem %s0, %s159
      $region32: #{tpu_custom_call.1} parent=27 // pred_fallthru
        _
    $region28: #{tpu_custom_call.1} parent=5 // pred_fallthru
      _
    %p161 = scmp.le.s32.totalorder 1, %s10
    %p162 = scmp.lt.s32.totalorder %s10, 3
    %p163 = pnand %p161, %p162
    %p164 = pneg %p163
    // Predicated region
    $region33: #{tpu_custom_call.1} parent=5 // pred_check
      _
    $region34: #{tpu_custom_call.1} parent=5 // pred_check_branch
      %166 = sbr.rel (%p163) target = $region36
    $region35: #{tpu_custom_call.1} parent=5 // pred_region
      %s167 = ssub.s32 %s10, 1
      %p168 = scmp.lt.s32.totalorder %s15, 1
      %s169 = scalar_select %p168, %s15, 1
      %s170 = smul.addr %s169, 7
      %s171 = smul.addr %s170, 4
      %s172 = scalar_lea.vmem %s0, %s171
      %p173 = pneg %p36
      %p174 = pneg %p33
      %p175 = pneg %p57
      %p176 = pneg %p54
      %p177 = pneg %p78
      %p178 = pneg %p75
      %p179 = pneg %p99
      %p180 = pneg %p96
      %p181 = pneg %p125
      %p182 = pneg %p122
      %p183 = scmp.lt.s32.totalorder %s15, 1
      %s184 = scalar_select %p183, %s15, 1
      %s185 = smul.addr %s184, 5
      %s186 = smul.addr %s185, 8
      %s187 = scalar_lea.vmem %s4, %s186
      %p188 = scmp.lt.s32.totalorder %s15, 1
      %s189 = scalar_select %p188, %s15, 1
      %s190 = smul.addr %s189, 7
      %s191 = smul.addr %s190, 4
      %s192 = scalar_lea.vmem %s0, %s191
      %p193 = scmp.lt.s32.totalorder %s15, 1
      %s194 = scalar_select %p193, %s15, 1
      %s195 = smul.addr %s194, 5
      %s196 = smul.addr %s195, 8
      %s197 = scalar_lea.vmem %s4, %s196
      %v199 = vld [vmem:[%s1] sm:$0xf]
      %v200 = vld [vmem:[%s1 + $0x4] sm:$0xf]
      %v201 = vld [vmem:[%s1 + $0x8] sm:$0xf]
      %v202 = vld [vmem:[%s1 + $0xc] sm:$0xf]
      %v203 = vld [vmem:[%s1 + $0x10] sm:$0xf]
      %v204 = vld [vmem:[%s1 + $0x14] sm:$0xf]
      %v205 = vld [vmem:[%s1 + $0x18] sm:$0xf]
      %v206 = vld [vmem:[%s1 + $0x1c] sm:$0xf]
      %v207 = vld [vmem:[%s2] sm:$0x1]
      %v208 = vld [vmem:[%s3] sm:$0x1]
      %v209 = vld [vmem:[%s192] sm:$0xf]
      %s210 = scalar_lea.vmem %s192, 4
      %v211 = vld [vmem:[%s210] sm:$0xf]
      %s212 = scalar_lea.vmem %s192, 8
      %v213 = vld [vmem:[%s212] sm:$0xf]
      %v215 = vunpack.c.l.b16 %v209
      %v216 = vpack.c.b16 %v215, %v215
      %v218 = vshrl.u32 %v216, 16
      %v220 = vshll.u32 %v216, 16
      %v222 = vrot.slane %v220, 1
      %v223 = vor.u32 %v218, %v222
      %224 = vrot.lane.b32.xlu0 %v223, 7
      %v225 = vpop.permute.xlu0 %224
      %v226 = vrot.slane %v216, 1
      %227 = vrot.lane.b32.xlu0 %v226, 14
      %v228 = vpop.permute.xlu0 %227
      %v230 = vunpack.c.l.b16 %v211
      %v231 = vpack.c.b16 %v230, %v230
      %232 = vrot.lane.b32.xlu0 %v231, 21
      %v233 = vpop.permute.xlu0 %232
      %v235 = vshrl.u32 %v231, 16
      %v237 = vshll.u32 %v231, 16
      %v239 = vrot.slane %v237, 1
      %v240 = vor.u32 %v235, %v239
      %241 = vrot.lane.b32.xlu0 %v240, 28
      %v242 = vpop.permute.xlu0 %241
      %v243 = vrot.slane %v231, 1
      %244 = vrot.lane.b32.xlu0 %v243, 35
      %v245 = vpop.permute.xlu0 %244
      %v247 = vunpack.c.l.b16 %v213
      %v248 = vpack.c.b16 %v247, %v247
      %249 = vrot.lane.b32.xlu0 %v248, 42
      %v250 = vpop.permute.xlu0 %249
      %v252 = vshrl.u32 %v248, 16
      %v254 = vshll.u32 %v248, 16
      %v256 = vrot.slane %v254, 1
      %v257 = vor.u32 %v252, %v256
      %258 = vrot.lane.b32.xlu0 %v257, 49
      %v259 = vpop.permute.xlu0 %258
      %v260 = vrot.slane %v248, 1
      %261 = vrot.lane.b32.xlu0 %v260, 56
      %v262 = vpop.permute.xlu0 %261
      %vm263 = vcmask 56320
      %v266 = vsel %vm263, %v209, %v225
      %vm267 = vcmask 113664
      %v269 = vsel %vm267, %v266, %v228
      %vm270 = vcmask 171008
      %v272 = vsel %vm270, %v269, %v233
      %vm273 = vcmask 228352
      %v275 = vsel %vm273, %v272, %v242
      %vm276 = vcmask 285696
      %v278 = vsel %vm276, %v275, %v245
      %vm279 = vcmask 343040
      %v281 = vsel %vm279, %v278, %v250
      %vm282 = vcmask 400384
      %v284 = vsel %vm282, %v281, %v259
      %vm285 = vcmask 457728
      %v287 = vsel %vm285, %v284, %v262
      %s288 = scalar_lea.vmem %s192, 12
      %v289 = vld [vmem:[%s288] sm:$0xf]
      %290 = vrot.lane.b32.xlu0 %v240, 7
      %v291 = vpop.permute.xlu0 %290
      %292 = vrot.lane.b32.xlu0 %v243, 14
      %v293 = vpop.permute.xlu0 %292
      %294 = vrot.lane.b32.xlu0 %v248, 21
      %v295 = vpop.permute.xlu0 %294
      %296 = vrot.lane.b32.xlu0 %v257, 28
      %v297 = vpop.permute.xlu0 %296
      %298 = vrot.lane.b32.xlu0 %v260, 35
      %v299 = vpop.permute.xlu0 %298
      %v301 = vunpack.c.l.b16 %v289
      %v302 = vpack.c.b16 %v301, %v301
      %303 = vrot.lane.b32.xlu0 %v302, 42
      %v304 = vpop.permute.xlu0 %303
      %v306 = vshrl.u32 %v302, 16
      %v308 = vshll.u32 %v302, 16
      %v310 = vrot.slane %v308, 1
      %v311 = vor.u32 %v306, %v310
      %312 = vrot.lane.b32.xlu0 %v311, 49
      %v313 = vpop.permute.xlu0 %312
      %v314 = vrot.slane %v302, 1
      %315 = vrot.lane.b32.xlu0 %v314, 56
      %v316 = vpop.permute.xlu0 %315
      %v319 = vsel %vm263, %v211, %v291
      %v321 = vsel %vm267, %v319, %v293
      %v323 = vsel %vm270, %v321, %v295
      %v325 = vsel %vm273, %v323, %v297
      %v327 = vsel %vm276, %v325, %v299
      %v329 = vsel %vm279, %v327, %v304
      %v331 = vsel %vm282, %v329, %v313
      %v333 = vsel %vm285, %v331, %v316
      %s334 = scalar_lea.vmem %s192, 16
      %v335 = vld [vmem:[%s334] sm:$0xf]
      %336 = vrot.lane.b32.xlu0 %v257, 7
      %v337 = vpop.permute.xlu0 %336
      %338 = vrot.lane.b32.xlu0 %v260, 14
      %v339 = vpop.permute.xlu0 %338
      %340 = vrot.lane.b32.xlu0 %v302, 21
      %v341 = vpop.permute.xlu0 %340
      %342 = vrot.lane.b32.xlu0 %v311, 28
      %v343 = vpop.permute.xlu0 %342
      %344 = vrot.lane.b32.xlu0 %v314, 35
      %v345 = vpop.permute.xlu0 %344
      %v347 = vunpack.c.l.b16 %v335
      %v348 = vpack.c.b16 %v347, %v347
      %349 = vrot.lane.b32.xlu0 %v348, 42
      %v350 = vpop.permute.xlu0 %349
      %v352 = vshrl.u32 %v348, 16
      %v354 = vshll.u32 %v348, 16
      %v356 = vrot.slane %v354, 1
      %v357 = vor.u32 %v352, %v356
      %358 = vrot.lane.b32.xlu0 %v357, 49
      %v359 = vpop.permute.xlu0 %358
      %v360 = vrot.slane %v348, 1
      %361 = vrot.lane.b32.xlu0 %v360, 56
      %v362 = vpop.permute.xlu0 %361
      %v365 = vsel %vm263, %v213, %v337
      %v367 = vsel %vm267, %v365, %v339
      %v369 = vsel %vm270, %v367, %v341
      %v371 = vsel %vm273, %v369, %v343
      %v373 = vsel %vm276, %v371, %v345
      %v375 = vsel %vm279, %v373, %v350
      %v377 = vsel %vm282, %v375, %v359
      %v379 = vsel %vm285, %v377, %v362
      %s380 = scalar_lea.vmem %s192, 20
      %v381 = vld [vmem:[%s380] sm:$0xf]
      %382 = vrot.lane.b32.xlu0 %v311, 7
      %v383 = vpop.permute.xlu0 %382
      %384 = vrot.lane.b32.xlu0 %v314, 14
      %v385 = vpop.permute.xlu0 %384
      %386 = vrot.lane.b32.xlu0 %v348, 21
      %v387 = vpop.permute.xlu0 %386
      %388 = vrot.lane.b32.xlu0 %v357, 28
      %v389 = vpop.permute.xlu0 %388
      %390 = vrot.lane.b32.xlu0 %v360, 35
      %v391 = vpop.permute.xlu0 %390
      %v393 = vunpack.c.l.b16 %v381
      %v394 = vpack.c.b16 %v393, %v393
      %395 = vrot.lane.b32.xlu0 %v394, 42
      %v396 = vpop.permute.xlu0 %395
      %v398 = vshrl.u32 %v394, 16
      %v400 = vshll.u32 %v394, 16
      %v402 = vrot.slane %v400, 1
      %v403 = vor.u32 %v398, %v402
      %404 = vrot.lane.b32.xlu0 %v403, 49
      %v405 = vpop.permute.xlu0 %404
      %v406 = vrot.slane %v394, 1
      %407 = vrot.lane.b32.xlu0 %v406, 56
      %v408 = vpop.permute.xlu0 %407
      %v411 = vsel %vm263, %v289, %v383
      %v413 = vsel %vm267, %v411, %v385
      %v415 = vsel %vm270, %v413, %v387
      %v417 = vsel %vm273, %v415, %v389
      %v419 = vsel %vm276, %v417, %v391
      %v421 = vsel %vm279, %v419, %v396
      %v423 = vsel %vm282, %v421, %v405
      %v425 = vsel %vm285, %v423, %v408
      %s426 = scalar_lea.vmem %s192, 24
      %v427 = vld [vmem:[%s426] sm:$0xf]
      %428 = vrot.lane.b32.xlu0 %v357, 7
      %v429 = vpop.permute.xlu0 %428
      %430 = vrot.lane.b32.xlu0 %v360, 14
      %v431 = vpop.permute.xlu0 %430
      %432 = vrot.lane.b32.xlu0 %v394, 21
      %v433 = vpop.permute.xlu0 %432
      %434 = vrot.lane.b32.xlu0 %v403, 28
      %v435 = vpop.permute.xlu0 %434
      %436 = vrot.lane.b32.xlu0 %v406, 35
      %v437 = vpop.permute.xlu0 %436
      %v439 = vunpack.c.l.b16 %v427
      %v440 = vpack.c.b16 %v439, %v439
      %441 = vrot.lane.b32.xlu0 %v440, 42
      %v442 = vpop.permute.xlu0 %441
      %v444 = vshrl.u32 %v440, 16
      %v446 = vshll.u32 %v440, 16
      %v448 = vrot.slane %v446, 1
      %v449 = vor.u32 %v444, %v448
      %450 = vrot.lane.b32.xlu0 %v449, 49
      %v451 = vpop.permute.xlu0 %450
      %v452 = vrot.slane %v440, 1
      %453 = vrot.lane.b32.xlu0 %v452, 56
      %v454 = vpop.permute.xlu0 %453
      %v457 = vsel %vm263, %v335, %v429
      %v459 = vsel %vm267, %v457, %v431
      %v461 = vsel %vm270, %v459, %v433
      %v463 = vsel %vm273, %v461, %v435
      %v465 = vsel %vm276, %v463, %v437
      %v467 = vsel %vm279, %v465, %v442
      %v469 = vsel %vm282, %v467, %v451
      %v471 = vsel %vm285, %v469, %v454
      %v473 = vrot.slane %v333, 5
      %v475 = vrot.slane %v379, 2
      %v477 = vrot.slane %v425, 7
      %v479 = vrot.slane %v471, 4
      %vm480 = vcmask 1042432
      %v482 = vsel %vm480, %v287, %v473
      %vm483 = vcmask 1045504
      %v485 = vsel %vm483, %v482, %v475
      %vm486 = vcmask 1040384
      %v488 = vsel %vm486, %v475, %v477
      %vm489 = vcmask 1043456
      %v491 = vsel %vm489, %v488, %v479
      %v500 = vunpack.c.l.b16 %v199
      %v501 = vunpack.c.l.b16 %v200
      %v502 = vunpack.c.l.b16 %v201
      %v503 = vunpack.c.l.b16 %v202
      %v504 = vunpack.c.l.b16 %v203
      %v505 = vunpack.c.l.b16 %v204
      %v506 = vunpack.c.l.b16 %v205
      %v507 = vunpack.c.l.b16 %v206
      %v508 = vpack.c.b16 %v501, %v500
      %v509 = vpack.c.b16 %v503, %v502
      %v510 = vpack.c.b16 %v505, %v504
      %v511 = vpack.c.b16 %v507, %v506
      %vm515 = vcmask 515072
      %v516 = vsel %vm515, %v485, 0
      %v518 = vsel %vm515, %v491, 0
      %vm520 = vcmask 1046528
      %vm521 = vcmask 1047552
      %v522 = vsel %vm520, 4294967295, 65535
      %v523 = vsel %vm521, %v522, 0
      %v525 = vand.u32 %v511, %v523
      %527 = vmatprep.subr.bf16.mxu0 0
      %528 = vmatpush1.bf16.msra.mxu0 %v508
      %529 = vmatprep.subr.bf16.mxu0 0
      %530 = vmatpush1.bf16.msra.mxu0 %v509
      %531 = vmatprep.subr.bf16.mxu0 0
      %532 = vmatpush1.bf16.msra.mxu0 %v510
      %533 = vmatprep.subr.bf16.mxu0 0
      %534 = vmatpush1.bf16.msra.mxu0 %v525
      %535 = vmatprep.subr.bf16.mxu0 0
      %536 = vmatpush1.bf16.msra.mxu0 0
      %537 = vmatprep.subr.bf16.mxu0 0
      %538 = vmatpush1.bf16.msra.mxu0 0
      %539 = vmatprep.subr.bf16.mxu0 0
      %540 = vmatpush1.bf16.msra.mxu0 0
      %541 = vmatprep.subr.bf16.mxu0 0
      %542 = vmatpush1.bf16.msra.mxu0 0
      %543 = vmatprep.subr.bf16.mxu0 0
      %544 = vmatpush1.bf16.msra.mxu0 0
      %545 = vmatprep.subr.bf16.mxu0 0
      %546 = vmatpush1.bf16.msra.mxu0 0
      %547 = vmatprep.subr.bf16.mxu0 0
      %548 = vmatpush1.bf16.msra.mxu0 0
      %549 = vmatprep.subr.bf16.mxu0 0
      %550 = vmatpush1.bf16.msra.mxu0 0
      %551 = vmatprep.subr.bf16.mxu0 0
      %552 = vmatpush1.bf16.msra.mxu0 0
      %553 = vmatprep.subr.bf16.mxu0 0
      %554 = vmatpush1.bf16.msra.mxu0 0
      %555 = vmatprep.subr.bf16.mxu0 0
      %556 = vmatpush1.bf16.msra.mxu0 0
      %557 = vmatprep.subr.bf16.mxu0 0
      %558 = vmatpush1.bf16.msra.mxu0 0
      %559 = vmatprep.mubr.bf16.mxu0 0
      %560 = vmatmul.mubr.bf16.gmra.mrb[0].mxu0 %v516
      %v561 = vpop.f32.mrb[0].mxu0
      %v562 = vadd.f32 0.0, %v561
      %v563 = vpop.f32.mrb[0].mxu0
      %v564 = vpop.f32.mrb[0].mxu0
      %v565 = vadd.f32 0.0, %v564
      %v566 = vpop.f32.mrb[0].mxu0
      %567 = vmatprep.mubr.bf16.mxu0 0
      %568 = vmatmul.mubr.bf16.gmra.mrb[0].mxu0 %v518
      %v569 = vpop.f32.mrb[0].mxu0
      %v570 = vadd.f32 0.0, %v569
      %v571 = vpop.f32.mrb[0].mxu0
      %v572 = vpop.f32.mrb[0].mxu0
      %v573 = vadd.f32 0.0, %v572
      %v574 = vpop.f32.mrb[0].mxu0
      %575 = vdwg.mxu0
      %v577 = vlaneseq
      %v578 = vshrl.u32 %v577, 7
      %v579 = vsub.s32 0, %v578
      %v580 = vrot.slane %v207, %v579
      %v582 = vmul.f32 %v562, %v580
      %v583 = vmul.f32 %v565, %v580
      %v584 = vmul.f32 %v570, %v580
      %v585 = vmul.f32 %v573, %v580
      %v587 = vlaneseq
      %v588 = vshrl.u32 %v587, 7
      %v589 = vsub.s32 0, %v588
      %v590 = vrot.slane %v208, %v589
      %v592 = vadd.f32 %v582, %v590
      %v593 = vadd.f32 %v583, %v590
      %v594 = vadd.f32 %v584, %v590
      %v595 = vadd.f32 %v585, %v590
      %vm596 = vcmask 29696
      %597 = vst.msk [vmem:[%s197] sm:$0x3f] %vm596, %v592
      %s598 = scalar_lea.vmem %s197, 8
      %vm599 = vcmask 31750
      %600 = vst.msk [vmem:[%s598 - $0x6] sm:$0xc0] %vm599, %v592
      %vm601 = vcmask 27648
      %602 = vst.msk [vmem:[%s598 + $0x2] sm:$0xf] %vm601, %v593
      %s603 = scalar_lea.vmem %s197, 16
      %vm604 = vcmask 31748
      %605 = vst.msk [vmem:[%s603 - $0x4] sm:$0xf0] %vm604, %v593
      %vm606 = vcmask 25600
      %607 = vst.msk [vmem:[%s603 + $0x4] sm:$0x3] %vm606, %v594
      %s608 = scalar_lea.vmem %s197, 24
      %vm609 = vcmask 31746
      %610 = vst.msk [vmem:[%s608 - $0x2] sm:$0xfc] %vm609, %v594
      %s611 = scalar_lea.vmem %s197, 32
      %612 = vst.msk [vmem:[%s611] sm:$0x3f] %vm596, %v595
      %p613 = scmp.lt.s32.totalorder %s15, 1
      %s614 = scalar_select %p613, %s15, 1
      %s615 = smul.addr %s614, 5
      %s616 = smul.addr %s615, 8
      %s617 = scalar_lea.vmem %s4, %s616
      // Predicated region
      $region37: #{tpu_custom_call.1} parent=35 // pred_check
        %p618 = pneg %p122
      $region38: #{tpu_custom_call.1} parent=35 // pred_check_branch
        %620 = sbr.rel (%p618) target = $region40
      $region39: #{tpu_custom_call.1} parent=35 // pred_region
        _
      $region40: #{tpu_custom_call.1} parent=35 // pred_fallthru
        _
    $region36: #{tpu_custom_call.1} parent=5 // pred_fallthru
      _
    %p621 = scmp.le.s32.totalorder 2, %s10
    // Predicated region
    $region41: #{tpu_custom_call.1} parent=5 // pred_check
      %p622 = pneg %p621
    $region42: #{tpu_custom_call.1} parent=5 // pred_check_branch
      %624 = sbr.rel (%p622) target = $region44
    $region43: #{tpu_custom_call.1} parent=5 // pred_region
      %s625 = ssub.s32 %s10, 2
      // Predicated region
      $region45: #{tpu_custom_call.1} parent=43 // pred_check
        %p626 = pneg %p128
      $region46: #{tpu_custom_call.1} parent=43 // pred_check_branch
        %628 = sbr.rel (%p626) target = $region48
      $region47: #{tpu_custom_call.1} parent=43 // pred_region
        %p629 = scmp.lt.s32.totalorder %s16, 1
        %s630 = scalar_select %p629, %s16, 1
        %s631 = smul.addr %s630, 5
        %s632 = smul.addr %s631, 8
        %s633 = scalar_lea.vmem %s4, %s632
      $region48: #{tpu_custom_call.1} parent=43 // pred_fallthru
        _
    $region44: #{tpu_custom_call.1} parent=5 // pred_fallthru
      _
  $region6: #{tpu_custom_call.1} parent=0 // loop_footer
    %s14 = sadd.s32 1, %s10
  $region7: #{tpu_custom_call.1} parent=0 // loop_footer_branch
    %9 = sbr.rel target = $region3
  $region8: #{tpu_custom_call.1} parent=0 // loop_exit
    _

</llo_original>
